<compile_context>
chip_gen: v6e
topology: v6e:2x2x1
jax: 0.10.0
libtpu: 0.0.40
codegen_flags: <defaults>
</compile_context>

<pallas_src>
import math

import jax
import jax.numpy as jnp
from jax.experimental import pallas as pl
from jax.experimental.pallas import tpu as pltpu


def _make_mar_kernel(k, w):
    """Kernel over one lane chunk of width W = k*w.

    a_ref : (T, T)    temporal mixing matrix A          (resident, const index)
    bd_ref: (w, w)    kron(I_bb, B_pad), block-diagonal (resident, const index)
    x_ref : (T, k*w)  lane-folded input slab chunk (batch-major, node-minor)
    o_ref : (T, k*w)
    """

    def kernel(a_ref, bd_ref, x_ref, o_ref):
        # First GEMM over the whole chunk: exact, lane-dense, MXU friendly.
        tmp = jnp.dot(a_ref[...], x_ref[...],
                      preferred_element_type=jnp.float32)      # (T, k*w) f32
        # Feed the second GEMM in the operand dtype (bf16 on v6e/v7x).
        tmp = tmp.astype(bd_ref.dtype)
        bd = bd_ref[...]                                        # load once
        # Static unroll over the k sub-slabs; bd stays resident across them
        # (review item 2: decouple step width from kron width).  All lane
        # offsets are static multiples of 128 -> aligned, unmasked stores.
        for j in range(k):
            sl = slice(j * w, (j + 1) * w)
            o_ref[:, sl] = jnp.dot(
                tmp[:, sl], bd, preferred_element_type=jnp.float32
            ).astype(o_ref.dtype)

    return kernel


def _plan_tiling(batch, num_nodes, *, w_cap=1024, lane_target=2048):
    """Choose (bb, N_pad, w, k, num_chunks, batch_p).

    bb     : batches folded into one kron unit (minimal 128-aligned width)
    N_pad  : node dim after optional zero-padding to a multiple of 128
    w      : kron unit width = bb * N_pad (always a multiple of 128)
    k      : units handled per grid step (W = k*w lanes per step)
    num_chunks : grid size (>= 2 whenever >= 2 units exist, for v7x megacore)
    batch_p: padded batch = num_chunks * k * bb
    """
    # (1) smallest bb that makes bb*N a multiple of 128.
    bb = 128 // math.gcd(num_nodes, 128)
    if bb * num_nodes <= w_cap:
        n_pad = num_nodes
    else:
        # (7/8) folding would make the kron block too big / too wasteful:
        # keep one batch per unit and zero-pad N up to a lane-dense width.
        bb = 1
        n_pad = ((num_nodes + 127) // 128) * 128
    w = bb * n_pad

    n_units = -(-batch // bb)                       # ceil(batch / bb)
    # (2) units per grid step: target ~lane_target lanes per step.
    k = max(1, min(lane_target // w, n_units))
    # (3) keep >= 2 grid chunks when possible (both v7x TensorCores busy).
    if n_units >= 2:
        k = max(1, min(k, n_units // 2))
    num_chunks = -(-n_units // k)                   # ceil
    batch_p = num_chunks * k * bb
    return bb, n_pad, w, k, num_chunks, batch_p


def _mar_lane_folded(A, bd, x_f, *, T, w, k, num_chunks, out_dtype):
    """Run the two-GEMM kernel on an already lane-folded (T, L) slab."""
    W = k * w
    L = num_chunks * W
    assert x_f.shape == (T, L)

    # Useful + kron FLOPs for this plan (advisory scheduling hint).
    flops = int(2 * T * T * L + 2 * T * w * L)
    op_bytes = jnp.dtype(x_f.dtype).itemsize
    bytes_accessed = int(op_bytes * (T * T + w * w + T * L)
                         + jnp.dtype(out_dtype).itemsize * T * L)

    return pl.pallas_call(
        _make_mar_kernel(k, w),
        out_shape=jax.ShapeDtypeStruct((T, L), out_dtype),
        grid_spec=pltpu.PrefetchScalarGridSpec(
            num_scalar_prefetch=0,
            grid=(num_chunks,),
            in_specs=[
                pl.BlockSpec((T, T), lambda c: (0, 0)),   # A   (resident)
                pl.BlockSpec((w, w), lambda c: (0, 0)),   # bd  (resident)
                pl.BlockSpec((T, W), lambda c: (0, c)),   # lane chunk of x
            ],
            out_specs=pl.BlockSpec((T, W), lambda c: (0, c)),
        ),
        compiler_params=pltpu.CompilerParams(
            dimension_semantics=("parallel",),
            # (6) allow XLA to fuse the relayout/cast producer into the slab
            # operand of the kernel instead of materializing it separately.
            allow_input_fusion=[False, False, True],
        ),
        cost_estimate=pl.CostEstimate(
            flops=flops, transcendentals=0, bytes_accessed=bytes_accessed),
    )(A, bd, x_f)


def mar_regressor_forward_time_major(A, B, x_tbn, *, mxu_dtype=jnp.bfloat16,
                                     w_cap=1024, lane_target=2048):
    """Transpose-free core: x_tbn is (T, batch, N); returns (T, batch, N).

    Preferred entry point when the surrounding model keeps activations
    time-major -- the lane fold is then a free reshape (no HBM relayout).
    """
    T, batch, N = x_tbn.shape
    assert A.shape == (T, T) and B.shape == (N, N)
    out_dtype = x_tbn.dtype

    bb, n_pad, w, k, num_chunks, batch_p = _plan_tiling(
        batch, N, w_cap=w_cap, lane_target=lane_target)

    x = x_tbn
    if batch_p != batch or n_pad != N:
        x = jnp.pad(x, ((0, 0), (0, batch_p - batch), (0, n_pad - N)))
    # Free fold (leading-dim merge): (T, batch_p, N_pad) -> (T, batch_p*N_pad)
    x_f = x.reshape(T, batch_p * n_pad).astype(mxu_dtype)

    Bp = B if n_pad == N else jnp.pad(B, ((0, n_pad - N), (0, n_pad - N)))
    bd = jnp.kron(jnp.eye(bb, dtype=Bp.dtype), Bp) if bb > 1 else Bp
    bd = bd.astype(mxu_dtype)
    a = A.astype(mxu_dtype)

    out_f = _mar_lane_folded(a, bd, x_f, T=T, w=w, k=k,
                             num_chunks=num_chunks, out_dtype=out_dtype)

    out = out_f.reshape(T, batch_p, n_pad)
    if batch_p != batch or n_pad != N:
        out = out[:, :batch, :N]
    return out


def mar_regressor_forward(A, B, res_t_s, *, mxu_dtype=jnp.bfloat16,
                          w_cap=1024, lane_target=2048):
    """Batch-major entry point matching the PyTorch module.

    A: (T, T), B: (N, N), res_t_s: (batch, T, N) -> (batch, T, N).
    The (batch, T, N) <-> (T, batch, N) relayouts are plain XLA; prefer the
    time-major entry point above to avoid them entirely.
    """
    batch, T, N = res_t_s.shape
    x_tbn = jnp.transpose(res_t_s, (1, 0, 2))
    out_tbn = mar_regressor_forward_time_major(
        A, B, x_tbn, mxu_dtype=mxu_dtype, w_cap=w_cap, lane_target=lane_target)
    return jnp.transpose(out_tbn, (1, 0, 2))


def make_params(num_nodes, seq_length, init="diagonal", scaling=0.001, *, key):
    """Parameter construction mirroring mar_regressor.__init__."""
    ka, kb = jax.random.split(key)
    if init == "random":
        A = jax.random.normal(ka, (seq_length, seq_length), jnp.float32) * scaling
        B = jax.random.normal(kb, (num_nodes, num_nodes), jnp.float32) * scaling
    elif init == "zeros":
        A = jnp.zeros((seq_length, seq_length), jnp.float32)
        B = jnp.zeros((num_nodes, num_nodes), jnp.float32)
    elif init == "diagonal":
        A = jnp.eye(seq_length, dtype=jnp.float32) * scaling
        B = jnp.eye(num_nodes, dtype=jnp.float32) * scaling
    else:
        A = jax.random.normal(ka, (seq_length, seq_length), jnp.float32) * scaling
        B = jnp.eye(num_nodes, dtype=jnp.float32) * scaling
    return A, B


if __name__ == "__main__":
    key = jax.random.PRNGKey(0)

    # Case 1: tiny default shapes (1 chunk, batch padded to a 128-lane unit).
    # Case 2: batch=16 -> minimal bb=8, two "parallel" chunks (v7x megacore).
    # Case 3: awkward N=13 -> bb=1 fallback with N zero-padded to 128 lanes,
    #         k=2 sub-slabs per step, 2 chunks.
    cases = [(2, 8, 16), (16, 8, 16), (4, 12, 13)]

    for batch, T, N in cases:
        key, kp, kx = jax.random.split(key, 3)
        # 'random' init -- a stronger numerical check than near-zero 'diagonal'.
        A, B = make_params(N, T, init="random", scaling=0.1, key=kp)
        res_t_s = jax.random.normal(kx, (batch, T, N), jnp.float32)

        ref = jnp.einsum("ts,bsn,nm->btm", A, res_t_s, B, precision="highest")

        # Default bf16-operand MXU path (v6e/v7x peak) and exact-ish f32 path.
        for mxu_dtype, atol, rtol in [(jnp.bfloat16, 1e-2, 5e-2),
                                      (jnp.float32, 2e-3, 2e-2)]:
            out = jax.block_until_ready(
                mar_regressor_forward(A, B, res_t_s, mxu_dtype=mxu_dtype))
            assert out.shape == (batch, T, N)
            err = float(jnp.max(jnp.abs(out - ref)))
            assert jnp.allclose(out, ref, atol=atol, rtol=rtol), (
                batch, T, N, str(mxu_dtype), err)

        # Transpose-free time-major entry point (review item 6).
        out_tm = jax.block_until_ready(
            mar_regressor_forward_time_major(
                A, B, jnp.transpose(res_t_s, (1, 0, 2))))
        assert out_tm.shape == (T, batch, N)
        assert jnp.allclose(jnp.transpose(out_tm, (1, 0, 2)), ref,
                            atol=1e-2, rtol=5e-2)

    print("KERNEL_OK")
</pallas_src>

<mosaic_0001>
module attributes {stable_mosaic.version = 11 : i64} {
  func.func @kernel(%arg0: i32, %arg1: memref<8x8xbf16, #tpu.memory_space<vmem>>, %arg2: memref<128x128xbf16, #tpu.memory_space<vmem>>, %arg3: memref<8x128xbf16, #tpu.memory_space<vmem>>, %arg4: memref<8x128xf32, #tpu.memory_space<vmem>>) attributes {dimension_semantics = [#tpu.dimension_semantics<parallel>], iteration_bounds = array<i64: 1>, scalar_prefetch = 0 : i64, scratch_operands = 0 : i64, tpu.core_type = #tpu.core_type<tc>, window_params = [{pipeline_mode = #tpu.pipeline_mode<synchronous>, transform_indices = @transform_0, window_bounds = array<i64: 8, 8>}, {pipeline_mode = #tpu.pipeline_mode<synchronous>, transform_indices = @transform_1, window_bounds = array<i64: 128, 128>}, {transform_indices = @transform_2, window_bounds = array<i64: 8, 128>}, {transform_indices = @transform_3, window_bounds = array<i64: 8, 128>}]} {
    %c0 = arith.constant 0 : index
    %c0_0 = arith.constant 0 : index
    %0 = vector.load %arg1[%c0, %c0_0] : memref<8x8xbf16, #tpu.memory_space<vmem>>, vector<8x8xbf16>
    %c0_1 = arith.constant 0 : index
    %c0_2 = arith.constant 0 : index
    %1 = vector.load %arg3[%c0_1, %c0_2] : memref<8x128xbf16, #tpu.memory_space<vmem>>, vector<8x128xbf16>
    %cst = arith.constant dense<0.000000e+00> : vector<8x128xf32>
    %2 = tpu.matmul %0, %1, %cst {dimension_numbers = #tpu.dot_dimension_numbers<[1], [0], [0], [1], [0, 0, 1, 1], [], []>} : vector<8x8xbf16>, vector<8x128xbf16>, vector<8x128xf32> -> vector<8x128xf32>
    %3 = arith.truncf %2 : vector<8x128xf32> to vector<8x128xbf16>
    %c0_3 = arith.constant 0 : index
    %c0_4 = arith.constant 0 : index
    %4 = vector.load %arg2[%c0_3, %c0_4] : memref<128x128xbf16, #tpu.memory_space<vmem>>, vector<128x128xbf16>
    %cst_5 = arith.constant dense<0.000000e+00> : vector<8x128xf32>
    %5 = tpu.matmul %3, %4, %cst_5 {dimension_numbers = #tpu.dot_dimension_numbers<[1], [0], [0], [1], [0, 0, 1, 1], [], []>} : vector<8x128xbf16>, vector<128x128xbf16>, vector<8x128xf32> -> vector<8x128xf32>
    %c0_6 = arith.constant 0 : index
    %c0_7 = arith.constant 0 : index
    %6 = vector.load %arg4[%c0_6, %c0_7] : memref<8x128xf32, #tpu.memory_space<vmem>>, vector<8x128xf32>
    tpu.vector_store %arg4[%c0_6, %c0_7], %5 {strides = array<i32>} : memref<8x128xf32, #tpu.memory_space<vmem>>, vector<8x128xf32>,
    return
  }
  func.func @transform_0(%arg0: i32) -> (i32, i32) {
    %c0_i32 = arith.constant 0 : i32
    %c0_i32_0 = arith.constant 0 : i32
    %c0_i32_1 = arith.constant 0 : i32
    return %c0_i32, %c0_i32_0 : i32, i32
  }
  func.func @transform_1(%arg0: i32) -> (i32, i32) {
    %c0_i32 = arith.constant 0 : i32
    %c0_i32_0 = arith.constant 0 : i32
    %c0_i32_1 = arith.constant 0 : i32
    return %c0_i32, %c0_i32_0 : i32, i32
  }
  func.func @transform_2(%arg0: i32) -> (i32, i32) {
    %c0_i32 = arith.constant 0 : i32
    %c0_i32_0 = arith.constant 0 : i32
    return %c0_i32, %arg0 : i32, i32
  }
  func.func @transform_3(%arg0: i32) -> (i32, i32) {
    %c0_i32 = arith.constant 0 : i32
    %c0_i32_0 = arith.constant 0 : i32
    return %c0_i32, %arg0 : i32, i32
  }
}

</mosaic_0001>

<llo_original>
// kernel: tpu_custom_call.1
$region0: #{tpu_custom_call.1}
  #allocation0 [shape = 'u32[]', space=smem, size = 0x4, offset = 0x4, fixed_abs, tag = 'smem constant byte address 0x4 - core index']
  #allocation1 [shape = 'u32[144,128]{1,0:T(1,128)}', space=vmem, size = 0x12000, scoped, tag = 'internal scratch']
  %s0 = inlined_call_operand.hbm [shape: bf16[8,8], index: 0, kind: input, shape index: {}]
  %s1 = inlined_call_operand.hbm [shape: bf16[128,128], index: 1, kind: input, shape index: {}]
  %s2 = inlined_call_operand.hbm [shape: bf16[8,128], index: 2, kind: input, shape index: {}]
  %s3 = inlined_call_operand.hbm [shape: f32[8,128], index: 3, kind: output, shape index: {}]
  %s4 = sld [smem:[#allocation0]]
  $region34: #{tpu_custom_call.1} parent=0
    _
  %s6 = ssub.s32 1, %s4
  %s7 = scalar_select 0, %s6, %s4
  $region1: #{tpu_custom_call.1} parent=0
    #allocation2 [shape = 'u8[2048]{0}', space=vmem, size = 0x800, scoped, tag = 'input window, operand 0, single buffered']
    #allocation3 [shape = 's32[1]{0}', space=sflag, size = 0x4, scoped, tag = 'scoped memory for tpu_custom_call.1']
    #allocation4 [shape = 's32[1]{0}', space=sflag, size = 0x4, scoped, tag = 'scoped memory for tpu_custom_call.1']
    #allocation5 [shape = 'u8[32768]{0}', space=vmem, size = 0x8000, scoped, tag = 'input window, operand 1, single buffered']
    #allocation6 [shape = 's32[1]{0}', space=sflag, size = 0x4, scoped, tag = 'scoped memory for tpu_custom_call.1']
    #allocation7 [shape = 'u8[2048]{0}', space=vmem, size = 0x800, scoped, tag = 'input window, operand 2, single buffered']
    #allocation8 [shape = 'u8[4096]{0}', space=vmem, size = 0x1000, scoped, tag = 'output window, operand 0, single buffered']
    %8 = vsyncpa [#allocation3], 0
    %9 = vsyncpa [#allocation6], 0
    %10 = vsyncpa [#allocation4], 0
    // Predicated region
    $region2: #{tpu_custom_call.1} parent=1 // pred_check
      _
    $region3: #{tpu_custom_call.1} parent=1 // pred_check_branch
      %12 = sbr.rel (0) target = $region5
    $region4: #{tpu_custom_call.1} parent=1 // pred_region
      %s14 = ssub.s32 64, 64
      %15 = vsyncadd [#allocation3], %s14
      %s17 = sshll.u32 [#allocation2], 4
      %s18 = int_to_ptr.vmem [resolvable:$true] %s17
      %20 = dma.hbm_to_vmem [thread:$0]  %s0, 64, %s18, [#allocation3]
    $region5: #{tpu_custom_call.1} parent=1 // pred_fallthru
      _
    // Predicated region
    $region6: #{tpu_custom_call.1} parent=1 // pred_check
      _
    $region7: #{tpu_custom_call.1} parent=1 // pred_check_branch
      %22 = sbr.rel (0) target = $region9
    $region8: #{tpu_custom_call.1} parent=1 // pred_region
      %s24 = ssub.s32 1024, 1024
      %25 = vsyncadd [#allocation6], %s24
      %s26 = sshll.u32 [#allocation5], 4
      %s27 = int_to_ptr.vmem [resolvable:$true] %s26
      %32 = dma.hbm_to_vmem [thread:$0]  %s1, 1024, %s27, [#allocation6], 64, 64, 4
    $region9: #{tpu_custom_call.1} parent=1 // pred_fallthru
      _
    // Predicated region
    $region10: #{tpu_custom_call.1} parent=1 // pred_check
      _
    $region11: #{tpu_custom_call.1} parent=1 // pred_check_branch
      %34 = sbr.rel (0) target = $region13
    $region12: #{tpu_custom_call.1} parent=1 // pred_region
      %s36 = ssub.s32 64, 64
      %37 = vsyncadd [#allocation6], %s36
      %s39 = sshll.u32 [#allocation7], 4
      %s40 = int_to_ptr.vmem [resolvable:$true] %s39
      %42 = dma.hbm_to_vmem [thread:$0]  %s2, 64, %s40, [#allocation6]
    $region13: #{tpu_custom_call.1} parent=1 // pred_fallthru
      _
    // Predicated region
    $region14: #{tpu_custom_call.1} parent=1 // pred_check
      _
    $region15: #{tpu_custom_call.1} parent=1 // pred_check_branch
      %44 = sbr.rel (0) target = $region17
    $region16: #{tpu_custom_call.1} parent=1 // pred_region
      %45 = dma.done [#allocation3], 64
    $region17: #{tpu_custom_call.1} parent=1 // pred_fallthru
      _
    // Predicated region
    $region18: #{tpu_custom_call.1} parent=1 // pred_check
      _
    $region19: #{tpu_custom_call.1} parent=1 // pred_check_branch
      %47 = sbr.rel (0) target = $region21
    $region20: #{tpu_custom_call.1} parent=1 // pred_region
      %48 = dma.done [#allocation6], 1024
    $region21: #{tpu_custom_call.1} parent=1 // pred_fallthru
      _
    // Predicated region
    $region22: #{tpu_custom_call.1} parent=1 // pred_check
      _
    $region23: #{tpu_custom_call.1} parent=1 // pred_check_branch
      %50 = sbr.rel (0) target = $region25
    $region24: #{tpu_custom_call.1} parent=1 // pred_region
      %51 = dma.done [#allocation6], 64
    $region25: #{tpu_custom_call.1} parent=1 // pred_fallthru
      _
    %v53 = vld [vmem:[#allocation2] sm:$0xf]
    %v54 = vld [vmem:[#allocation7] sm:$0xf]
    %vm55 = vcmask 64512
    %v57 = vsel %vm55, %v53, 0
    %vm59 = vcmask 1043456
    %v61 = vsel %vm59, %v54, 0
    %63 = vmatprep.subr.bf16.mxu0 0
    %64 = vmatpush1.bf16.msra.mxu0 0
    %65 = vmatprep.subr.bf16.mxu0 0
    %66 = vmatpush1.bf16.msra.mxu0 0
    %67 = vmatprep.subr.bf16.mxu0 0
    %68 = vmatpush1.bf16.msra.mxu0 0
    %69 = vmatprep.subr.bf16.mxu0 0
    %70 = vmatpush1.bf16.msra.mxu0 0
    %71 = vmatprep.subr.bf16.mxu0 0
    %72 = vmatpush1.bf16.msra.mxu0 0
    %73 = vmatprep.subr.bf16.mxu0 0
    %74 = vmatpush1.bf16.msra.mxu0 0
    %75 = vmatprep.subr.bf16.mxu0 0
    %76 = vmatpush1.bf16.msra.mxu0 0
    %77 = vmatprep.subr.bf16.mxu0 0
    %78 = vmatpush1.bf16.msra.mxu0 %v61
    %79 = vmatprep.subr.bf16.mxu0 0
    %80 = vmatpush2.bf16.msra.mxu0 0
    %81 = vmatprep.subr.bf16.mxu0 0
    %82 = vmatpush2.bf16.msra.mxu0 0
    %83 = vmatprep.subr.bf16.mxu0 0
    %84 = vmatpush2.bf16.msra.mxu0 0
    %85 = vmatprep.subr.bf16.mxu0 0
    %86 = vmatpush2.bf16.msra.mxu0 0
    %87 = vmatprep.subr.bf16.mxu0 0
    %88 = vmatpush2.bf16.msra.mxu0 0
    %89 = vmatprep.subr.bf16.mxu0 0
    %90 = vmatpush2.bf16.msra.mxu0 0
    %91 = vmatprep.subr.bf16.mxu0 0
    %92 = vmatpush2.bf16.msra.mxu0 0
    %93 = vmatprep.subr.bf16.mxu0 0
    %94 = vmatpush2.bf16.msra.mxu0 0
    %95 = vmatprep.mubr.bf16.mxu0 0
    %96 = vmatmul.mubr.bf16.gmra.mxu0 %v57
    %v97 = vpop.f32.mrf.mxu0
    %v98 = vadd.f32 0.0, %v97
    %v99 = vpop.f32.mrf.mxu0
    %v100 = vpop.f32.mrf.mxu0
    %v101 = vpop.f32.mrf.mxu0
    %102 = vdwg.mxu0
    %v103 = vpack.c.bf16 %v98, %v98
    %v104 = vld [vmem:[#allocation5] sm:$0xf]
    %v105 = vld [vmem:[#allocation5 + $0x4] sm:$0xf]
    %v106 = vld [vmem:[#allocation5 + $0x8] sm:$0xf]
    %v107 = vld [vmem:[#allocation5 + $0xc] sm:$0xf]
    %v108 = vld [vmem:[#allocation5 + $0x10] sm:$0xf]
    %v109 = vld [vmem:[#allocation5 + $0x14] sm:$0xf]
    %v110 = vld [vmem:[#allocation5 + $0x18] sm:$0xf]
    %v111 = vld [vmem:[#allocation5 + $0x1c] sm:$0xf]
    %v112 = vld [vmem:[#allocation5 + $0x20] sm:$0xf]
    %v113 = vld [vmem:[#allocation5 + $0x24] sm:$0xf]
    %v114 = vld [vmem:[#allocation5 + $0x28] sm:$0xf]
    %v115 = vld [vmem:[#allocation5 + $0x2c] sm:$0xf]
    %v116 = vld [vmem:[#allocation5 + $0x30] sm:$0xf]
    %v117 = vld [vmem:[#allocation5 + $0x34] sm:$0xf]
    %v118 = vld [vmem:[#allocation5 + $0x38] sm:$0xf]
    %v119 = vld [vmem:[#allocation5 + $0x3c] sm:$0xf]
    %v136 = vunpack.c.l.b16 %v104
    %v137 = vunpack.c.l.b16 %v105
    %v138 = vunpack.c.l.b16 %v106
    %v139 = vunpack.c.l.b16 %v107
    %v140 = vunpack.c.l.b16 %v108
    %v141 = vunpack.c.l.b16 %v109
    %v142 = vunpack.c.l.b16 %v110
    %v143 = vunpack.c.l.b16 %v111
    %v144 = vunpack.c.l.b16 %v112
    %v145 = vunpack.c.l.b16 %v113
    %v146 = vunpack.c.l.b16 %v114
    %v147 = vunpack.c.l.b16 %v115
    %v148 = vunpack.c.l.b16 %v116
    %v149 = vunpack.c.l.b16 %v117
    %v150 = vunpack.c.l.b16 %v118
    %v151 = vunpack.c.l.b16 %v119
    %v152 = vpack.c.b16 %v137, %v136
    %v153 = vpack.c.b16 %v139, %v138
    %v154 = vpack.c.b16 %v141, %v140
    %v155 = vpack.c.b16 %v143, %v142
    %v156 = vpack.c.b16 %v145, %v144
    %v157 = vpack.c.b16 %v147, %v146
    %v158 = vpack.c.b16 %v149, %v148
    %v159 = vpack.c.b16 %v151, %v150
    %168 = vmatprep.subr.bf16.mxu0 0
    %169 = vmatpush1.bf16.msra.mxu0 %v159
    %170 = vmatprep.subr.bf16.mxu0 0
    %171 = vmatpush1.bf16.msra.mxu0 %v158
    %172 = vmatprep.subr.bf16.mxu0 0
    %173 = vmatpush1.bf16.msra.mxu0 %v157
    %174 = vmatprep.subr.bf16.mxu0 0
    %175 = vmatpush1.bf16.msra.mxu0 %v156
    %176 = vmatprep.subr.bf16.mxu0 0
    %177 = vmatpush1.bf16.msra.mxu0 %v155
    %178 = vmatprep.subr.bf16.mxu0 0
    %179 = vmatpush1.bf16.msra.mxu0 %v154
    %180 = vmatprep.subr.bf16.mxu0 0
    %181 = vmatpush1.bf16.msra.mxu0 %v153
    %182 = vmatprep.subr.bf16.mxu0 0
    %183 = vmatpush1.bf16.msra.mxu0 %v152
    %184 = vmatprep.subr.bf16.mxu0 0
    %185 = vmatpush2.bf16.msra.mxu0 0
    %186 = vmatprep.subr.bf16.mxu0 0
    %187 = vmatpush2.bf16.msra.mxu0 0
    %188 = vmatprep.subr.bf16.mxu0 0
    %189 = vmatpush2.bf16.msra.mxu0 0
    %190 = vmatprep.subr.bf16.mxu0 0
    %191 = vmatpush2.bf16.msra.mxu0 0
    %192 = vmatprep.subr.bf16.mxu0 0
    %193 = vmatpush2.bf16.msra.mxu0 0
    %194 = vmatprep.subr.bf16.mxu0 0
    %195 = vmatpush2.bf16.msra.mxu0 0
    %196 = vmatprep.subr.bf16.mxu0 0
    %197 = vmatpush2.bf16.msra.mxu0 0
    %198 = vmatprep.subr.bf16.mxu0 0
    %199 = vmatpush2.bf16.msra.mxu0 0
    %200 = vmatprep.mubr.bf16.mxu0 0
    %201 = vmatmul.mubr.bf16.gmra.mxu0 %v103
    %v202 = vpop.f32.mrf.mxu0
    %v203 = vadd.f32 0.0, %v202
    %v204 = vpop.f32.mrf.mxu0
    %v205 = vpop.f32.mrf.mxu0
    %v206 = vpop.f32.mrf.mxu0
    %207 = vdwg.mxu0
    %208 = vst [vmem:[#allocation8] sm:$0xff] %v203
    // Predicated region
    $region26: #{tpu_custom_call.1} parent=1 // pred_check
      _
    $region27: #{tpu_custom_call.1} parent=1 // pred_check_branch
      %210 = sbr.rel (0) target = $region29
    $region28: #{tpu_custom_call.1} parent=1 // pred_region
      %s212 = ssub.s32 128, 128
      %213 = vsyncadd [#allocation4], %s212
      %s215 = sshll.u32 [#allocation8], 4
      %s216 = int_to_ptr.vmem [resolvable:$true] %s215
      %218 = dma.vmem_to_hbm [thread:$0]  %s216, 128, %s3, [#allocation4]
    $region29: #{tpu_custom_call.1} parent=1 // pred_fallthru
      _
    // Predicated region
    $region30: #{tpu_custom_call.1} parent=1 // pred_check
      _
    $region31: #{tpu_custom_call.1} parent=1 // pred_check_branch
      %220 = sbr.rel (0) target = $region33
    $region32: #{tpu_custom_call.1} parent=1 // pred_region
      %221 = dma.done [#allocation4], 128
    $region33: #{tpu_custom_call.1} parent=1 // pred_fallthru
      _
    %222 = vsyncpa [#allocation3], 1
    %223 = vsyncpa [#allocation6], 1
    %224 = vsyncpa [#allocation4], 1

</llo_original>
